<compile_context>
chip_gen: v5e
topology: v5e:2x2
jax: 0.10.0
libtpu: 0.0.40
codegen_flags: <defaults>
</compile_context>

<pallas_src>
import functools

import jax
import jax.numpy as jnp
from jax.experimental import pallas as pl
from jax.experimental.pallas import tpu as pltpu


def _bert_embedding_kernel(nblk_pos, n_chunks, chunk, nsem,
                           seq_ids_ref,   # SMEM (M,) int32 -- scalar-prefetched token ids
                           seg_ref,       # VMEM (TM, 1) int32 segment ids for this tile
                           tok_hbm_ref,   # HBM  (V, D) token table (manual row-gather DMA)
                           segtab_ref,    # VMEM (NS, D) segment table (resident)
                           pos_ref,       # VMEM (max_len, D) positional table (resident)
                           out_ref,       # VMEM (TM, D) output tile
                           tok_buf,       # VMEM (TM, D) gathered token rows
                           dma_sems):     # DMA semaphore ring (NSEM,)
    tm, d = out_ref.shape
    ns = segtab_ref.shape[0]
    base = pl.program_id(0) * tm

    def issue_row(r, slot):
        tid = seq_ids_ref[base + r]
        pltpu.make_async_copy(tok_hbm_ref.at[pl.ds(tid, 1)],
                              tok_buf.at[pl.ds(r, 1)],
                              dma_sems.at[slot]).start()

    def wait_row(r, slot):
        # Reconstruct the copy descriptor at wait time (shape + semaphore is all that
        # matters); no Python list of copy objects is kept.
        pltpu.make_async_copy(tok_hbm_ref.at[pl.ds(0, 1)],
                              tok_buf.at[pl.ds(r, 1)],
                              dma_sems.at[slot]).wait()

    # --- 1) Prologue: put the first (up to) two 8-row chunks of gather DMAs in flight.
    for c in range(min(2, n_chunks)):
        for j in range(chunk):
            r = c * chunk + j
            issue_row(r, r % nsem)

    # --- 2) VPU work under the DMA shadow: segment + positional embedding.
    # Segment embedding: (ns-1) selects against the tiny resident table; compare on the
    # (tm, 1) ids and let the select broadcast (no (tm, d) int32 temporary).
    seg_ids = seg_ref[...]                                           # (tm, 1) int32
    seg_e = jnp.broadcast_to(segtab_ref[pl.ds(0, 1), :], (tm, d))    # default: segment 0
    for s in range(1, ns):
        seg_e = jnp.where(seg_ids == s, segtab_ref[pl.ds(s, 1), :], seg_e)

    # Positional rows for this tile, sliced from the resident (max_len, D) table.
    if nblk_pos == 1:
        pos_rows = pos_ref[...]
    else:
        pos_start = pl.multiple_of((pl.program_id(0) % nblk_pos) * tm, tm)
        pos_rows = pos_ref[pl.ds(pos_start, tm), :]

    out_ref[...] = pos_rows.astype(jnp.float32) + seg_e.astype(jnp.float32)

    # --- 3) Chunked wait + accumulate: wait one 8-row chunk (one f32 sublane group),
    #        refill the semaphore ring with the chunk two ahead, add the landed rows.
    @pl.loop(0, n_chunks)
    def _(c):
        r0 = c * chunk
        for j in range(chunk):
            r = r0 + j
            wait_row(r, r % nsem)
        if n_chunks > 2:
            @pl.when(c + 2 < n_chunks)
            def _():
                for j in range(chunk):
                    r = (c + 2) * chunk + j
                    issue_row(r, r % nsem)
        r0h = pl.multiple_of(r0, chunk)
        out_ref[pl.ds(r0h, chunk), :] = (
            out_ref[pl.ds(r0h, chunk), :]
            + tok_buf[pl.ds(r0h, chunk), :].astype(jnp.float32))


def bert_embedding(seq, seg, tok_table, seg_table, pos_table, *, tm=None):
    B, S = seq.shape
    V, D = tok_table.shape
    NS = seg_table.shape[0]
    max_len = pos_table.shape[0]
    # Same constraint the PyTorch forward implicitly has (broadcast add of pos_embed).
    assert S == max_len, "seq_len must equal max_len (as in the PyTorch forward)"
    M = B * S

    CHUNK = 8    # rows per wait/accumulate chunk (one f32 sublane group)
    NSEM = 16    # DMA semaphore ring: up to two chunks in flight

    if tm is None:
        tm = min(S, 512)
        # Keep at least 2 grid tiles so ("parallel",) can feed both TCs on v7x.
        while tm > CHUNK and (M // tm) < 2:
            tm //= 2
    assert S % tm == 0 and M % tm == 0, "row tile must divide the sequence length"
    assert tm % CHUNK == 0, "row tile must be a multiple of 8"

    n_chunks = tm // CHUNK
    nblk_pos = S // tm

    seq_flat = seq.reshape(M).astype(jnp.int32)     # scalar-prefetched -> SMEM
    seg_col = seg.reshape(M, 1).astype(jnp.int32)   # per-row segment ids -> VMEM tile

    kernel = functools.partial(_bert_embedding_kernel, nblk_pos, n_chunks, CHUNK, NSEM)

    out = pl.pallas_call(
        kernel,
        out_shape=jax.ShapeDtypeStruct((M, D), jnp.float32),
        grid_spec=pltpu.PrefetchScalarGridSpec(
            num_scalar_prefetch=1,
            grid=(M // tm,),
            in_specs=[
                # segment ids for this row tile
                pl.BlockSpec((tm, 1), lambda i, ids: (i, 0)),
                # token table stays in HBM; gathered row-by-row via DMA in the kernel
                pl.BlockSpec(memory_space=pl.ANY),
                # tiny segment table, VMEM resident (constant block index -> fetched once)
                pl.BlockSpec((NS, D), lambda i, ids: (0, 0)),
                # full positional table, VMEM resident (constant block index -> fetched once)
                pl.BlockSpec((max_len, D), lambda i, ids: (0, 0)),
            ],
            out_specs=pl.BlockSpec((tm, D), lambda i, ids: (i, 0)),
            scratch_shapes=[
                pltpu.VMEM((tm, D), tok_table.dtype),   # gathered token rows
                pltpu.SemaphoreType.DMA((NSEM,)),       # small DMA semaphore ring
            ],
        ),
        compiler_params=pltpu.CompilerParams(
            dimension_semantics=("parallel",),           # megacore sharding on multi-TC chips
        ),
    )(seq_flat, seg_col, tok_table, seg_table, pos_table)
    return out.reshape(B, S, D)


if __name__ == "__main__":
    # Module hyperparameters (small, TPU-friendly shapes).
    vocab_size, n_segments, max_len, embed_dim, dropout = 32, 2, 8, 128, 0.1
    B, S = 2, max_len  # forward's broadcast requires seq_len == max_len

    key = jax.random.PRNGKey(0)
    k_tok, k_segtab, k_pos, k_seq, k_seg = jax.random.split(key, 5)

    # nn.Embedding default init: N(0, 1).
    tok_table = jax.random.normal(k_tok, (vocab_size, embed_dim), jnp.float32)
    seg_table = jax.random.normal(k_segtab, (n_segments, embed_dim), jnp.float32)
    pos_table = jax.random.normal(k_pos, (max_len, embed_dim), jnp.float32)

    seq = jax.random.randint(k_seq, (B, S), 0, vocab_size, dtype=jnp.int32)
    seg = jax.random.randint(k_seg, (B, S), 0, n_segments, dtype=jnp.int32)

    out = jax.block_until_ready(bert_embedding(seq, seg, tok_table, seg_table, pos_table))

    # Pure-JAX reference (gather semantics identical to nn.Embedding).
    ref = tok_table[seq] + seg_table[seg] + pos_table[jnp.arange(max_len)][None, :, :]
    assert out.shape == (B, S, embed_dim)
    assert jnp.allclose(out, ref, atol=1e-5), "kernel output mismatch vs reference"
    print("KERNEL_OK")
</pallas_src>

<mosaic_0001>
module attributes {stable_mosaic.version = 11 : i64} {
  func.func @_bert_embedding_kernel(%arg0: i32, %arg1: memref<16xi32, #tpu.memory_space<smem>>, %arg2: memref<8x1xi32, #tpu.memory_space<vmem>>, %arg3: memref<32x128xf32, #tpu.memory_space<any>>, %arg4: memref<2x128xf32, #tpu.memory_space<vmem>>, %arg5: memref<8x128xf32, #tpu.memory_space<vmem>>, %arg6: memref<8x128xf32, #tpu.memory_space<vmem>>, %arg7: memref<8x128xf32, #tpu.memory_space<vmem>>, %arg8: memref<16x!tpu.dma_semaphore, #tpu.memory_space<semaphore_mem>>) attributes {dimension_semantics = [#tpu.dimension_semantics<parallel>], iteration_bounds = array<i64: 2>, scalar_prefetch = 1 : i64, scratch_operands = 2 : i64, tpu.core_type = #tpu.core_type<tc>, window_params = [{transform_indices = @transform_0, window_bounds = array<i64: 8, 1>}, {}, {pipeline_mode = #tpu.pipeline_mode<synchronous>, transform_indices = @transform_2, window_bounds = array<i64: 2, 128>}, {pipeline_mode = #tpu.pipeline_mode<synchronous>, transform_indices = @transform_3, window_bounds = array<i64: 8, 128>}, {transform_indices = @transform_4, window_bounds = array<i64: 8, 128>}]} {
    %c8_i32 = arith.constant 8 : i32
    %0 = arith.muli %arg0, %c8_i32 : i32
    %c0_i32 = arith.constant 0 : i32
    %1 = arith.addi %0, %c0_i32 : i32
    %2 = arith.index_cast %1 : i32 to index
    %3 = memref.load %arg1[%2] : memref<16xi32, #tpu.memory_space<smem>>
    %c0_i32_0 = arith.constant 0 : i32
    %c0_i32_1 = arith.constant 0 : i32
    %4 = tpu.memref_slice %arg3[%3, %c0_i32_1] : memref<32x128xf32, #tpu.memory_space<any>> -> memref<1x128xf32, #tpu.memory_space<any>>
    %c0_i32_2 = arith.constant 0 : i32
    %c0_i32_3 = arith.constant 0 : i32
    %5 = tpu.memref_slice %arg7[%c0_i32_2, %c0_i32_3] : memref<8x128xf32, #tpu.memory_space<vmem>> -> memref<1x128xf32, #tpu.memory_space<vmem>>
    %6 = tpu.memref_slice %arg8[%c0_i32_0] : memref<16x!tpu.dma_semaphore, #tpu.memory_space<semaphore_mem>> -> memref<1x!tpu.dma_semaphore, #tpu.memory_space<semaphore_mem>>
    %7 = tpu.memref_squeeze %6 : memref<1x!tpu.dma_semaphore, #tpu.memory_space<semaphore_mem>> -> memref<!tpu.dma_semaphore, #tpu.memory_space<semaphore_mem>>
    tpu.enqueue_dma source(%4 : memref<1x128xf32, #tpu.memory_space<any>>) target(%5 : memref<1x128xf32, #tpu.memory_space<vmem>>) target_semaphore(%7 : memref<!tpu.dma_semaphore, #tpu.memory_space<semaphore_mem>>)
    %c1_i32 = arith.constant 1 : i32
    %8 = arith.addi %0, %c1_i32 : i32
    %9 = arith.index_cast %8 : i32 to index
    %10 = memref.load %arg1[%9] : memref<16xi32, #tpu.memory_space<smem>>
    %c1_i32_4 = arith.constant 1 : i32
    %c0_i32_5 = arith.constant 0 : i32
    %11 = tpu.memref_slice %arg3[%10, %c0_i32_5] : memref<32x128xf32, #tpu.memory_space<any>> -> memref<1x128xf32, #tpu.memory_space<any>>
    %c1_i32_6 = arith.constant 1 : i32
    %c0_i32_7 = arith.constant 0 : i32
    %12 = tpu.memref_slice %arg7[%c1_i32_6, %c0_i32_7] : memref<8x128xf32, #tpu.memory_space<vmem>> -> memref<1x128xf32, #tpu.memory_space<vmem>>
    %13 = tpu.memref_slice %arg8[%c1_i32_4] : memref<16x!tpu.dma_semaphore, #tpu.memory_space<semaphore_mem>> -> memref<1x!tpu.dma_semaphore, #tpu.memory_space<semaphore_mem>>
    %14 = tpu.memref_squeeze %13 : memref<1x!tpu.dma_semaphore, #tpu.memory_space<semaphore_mem>> -> memref<!tpu.dma_semaphore, #tpu.memory_space<semaphore_mem>>
    tpu.enqueue_dma source(%11 : memref<1x128xf32, #tpu.memory_space<any>>) target(%12 : memref<1x128xf32, #tpu.memory_space<vmem>>) target_semaphore(%14 : memref<!tpu.dma_semaphore, #tpu.memory_space<semaphore_mem>>)
    %c2_i32 = arith.constant 2 : i32
    %15 = arith.addi %0, %c2_i32 : i32
    %16 = arith.index_cast %15 : i32 to index
    %17 = memref.load %arg1[%16] : memref<16xi32, #tpu.memory_space<smem>>
    %c2_i32_8 = arith.constant 2 : i32
    %c0_i32_9 = arith.constant 0 : i32
    %18 = tpu.memref_slice %arg3[%17, %c0_i32_9] : memref<32x128xf32, #tpu.memory_space<any>> -> memref<1x128xf32, #tpu.memory_space<any>>
    %c2_i32_10 = arith.constant 2 : i32
    %c0_i32_11 = arith.constant 0 : i32
    %19 = tpu.memref_slice %arg7[%c2_i32_10, %c0_i32_11] : memref<8x128xf32, #tpu.memory_space<vmem>> -> memref<1x128xf32, #tpu.memory_space<vmem>>
    %20 = tpu.memref_slice %arg8[%c2_i32_8] : memref<16x!tpu.dma_semaphore, #tpu.memory_space<semaphore_mem>> -> memref<1x!tpu.dma_semaphore, #tpu.memory_space<semaphore_mem>>
    %21 = tpu.memref_squeeze %20 : memref<1x!tpu.dma_semaphore, #tpu.memory_space<semaphore_mem>> -> memref<!tpu.dma_semaphore, #tpu.memory_space<semaphore_mem>>
    tpu.enqueue_dma source(%18 : memref<1x128xf32, #tpu.memory_space<any>>) target(%19 : memref<1x128xf32, #tpu.memory_space<vmem>>) target_semaphore(%21 : memref<!tpu.dma_semaphore, #tpu.memory_space<semaphore_mem>>)
    %c3_i32 = arith.constant 3 : i32
    %22 = arith.addi %0, %c3_i32 : i32
    %23 = arith.index_cast %22 : i32 to index
    %24 = memref.load %arg1[%23] : memref<16xi32, #tpu.memory_space<smem>>
    %c3_i32_12 = arith.constant 3 : i32
    %c0_i32_13 = arith.constant 0 : i32
    %25 = tpu.memref_slice %arg3[%24, %c0_i32_13] : memref<32x128xf32, #tpu.memory_space<any>> -> memref<1x128xf32, #tpu.memory_space<any>>
    %c3_i32_14 = arith.constant 3 : i32
    %c0_i32_15 = arith.constant 0 : i32
    %26 = tpu.memref_slice %arg7[%c3_i32_14, %c0_i32_15] : memref<8x128xf32, #tpu.memory_space<vmem>> -> memref<1x128xf32, #tpu.memory_space<vmem>>
    %27 = tpu.memref_slice %arg8[%c3_i32_12] : memref<16x!tpu.dma_semaphore, #tpu.memory_space<semaphore_mem>> -> memref<1x!tpu.dma_semaphore, #tpu.memory_space<semaphore_mem>>
    %28 = tpu.memref_squeeze %27 : memref<1x!tpu.dma_semaphore, #tpu.memory_space<semaphore_mem>> -> memref<!tpu.dma_semaphore, #tpu.memory_space<semaphore_mem>>
    tpu.enqueue_dma source(%25 : memref<1x128xf32, #tpu.memory_space<any>>) target(%26 : memref<1x128xf32, #tpu.memory_space<vmem>>) target_semaphore(%28 : memref<!tpu.dma_semaphore, #tpu.memory_space<semaphore_mem>>)
    %c4_i32 = arith.constant 4 : i32
    %29 = arith.addi %0, %c4_i32 : i32
    %30 = arith.index_cast %29 : i32 to index
    %31 = memref.load %arg1[%30] : memref<16xi32, #tpu.memory_space<smem>>
    %c4_i32_16 = arith.constant 4 : i32
    %c0_i32_17 = arith.constant 0 : i32
    %32 = tpu.memref_slice %arg3[%31, %c0_i32_17] : memref<32x128xf32, #tpu.memory_space<any>> -> memref<1x128xf32, #tpu.memory_space<any>>
    %c4_i32_18 = arith.constant 4 : i32
    %c0_i32_19 = arith.constant 0 : i32
    %33 = tpu.memref_slice %arg7[%c4_i32_18, %c0_i32_19] : memref<8x128xf32, #tpu.memory_space<vmem>> -> memref<1x128xf32, #tpu.memory_space<vmem>>
    %34 = tpu.memref_slice %arg8[%c4_i32_16] : memref<16x!tpu.dma_semaphore, #tpu.memory_space<semaphore_mem>> -> memref<1x!tpu.dma_semaphore, #tpu.memory_space<semaphore_mem>>
    %35 = tpu.memref_squeeze %34 : memref<1x!tpu.dma_semaphore, #tpu.memory_space<semaphore_mem>> -> memref<!tpu.dma_semaphore, #tpu.memory_space<semaphore_mem>>
    tpu.enqueue_dma source(%32 : memref<1x128xf32, #tpu.memory_space<any>>) target(%33 : memref<1x128xf32, #tpu.memory_space<vmem>>) target_semaphore(%35 : memref<!tpu.dma_semaphore, #tpu.memory_space<semaphore_mem>>)
    %c5_i32 = arith.constant 5 : i32
    %36 = arith.addi %0, %c5_i32 : i32
    %37 = arith.index_cast %36 : i32 to index
    %38 = memref.load %arg1[%37] : memref<16xi32, #tpu.memory_space<smem>>
    %c5_i32_20 = arith.constant 5 : i32
    %c0_i32_21 = arith.constant 0 : i32
    %39 = tpu.memref_slice %arg3[%38, %c0_i32_21] : memref<32x128xf32, #tpu.memory_space<any>> -> memref<1x128xf32, #tpu.memory_space<any>>
    %c5_i32_22 = arith.constant 5 : i32
    %c0_i32_23 = arith.constant 0 : i32
    %40 = tpu.memref_slice %arg7[%c5_i32_22, %c0_i32_23] : memref<8x128xf32, #tpu.memory_space<vmem>> -> memref<1x128xf32, #tpu.memory_space<vmem>>
    %41 = tpu.memref_slice %arg8[%c5_i32_20] : memref<16x!tpu.dma_semaphore, #tpu.memory_space<semaphore_mem>> -> memref<1x!tpu.dma_semaphore, #tpu.memory_space<semaphore_mem>>
    %42 = tpu.memref_squeeze %41 : memref<1x!tpu.dma_semaphore, #tpu.memory_space<semaphore_mem>> -> memref<!tpu.dma_semaphore, #tpu.memory_space<semaphore_mem>>
    tpu.enqueue_dma source(%39 : memref<1x128xf32, #tpu.memory_space<any>>) target(%40 : memref<1x128xf32, #tpu.memory_space<vmem>>) target_semaphore(%42 : memref<!tpu.dma_semaphore, #tpu.memory_space<semaphore_mem>>)
    %c6_i32 = arith.constant 6 : i32
    %43 = arith.addi %0, %c6_i32 : i32
    %44 = arith.index_cast %43 : i32 to index
    %45 = memref.load %arg1[%44] : memref<16xi32, #tpu.memory_space<smem>>
    %c6_i32_24 = arith.constant 6 : i32
    %c0_i32_25 = arith.constant 0 : i32
    %46 = tpu.memref_slice %arg3[%45, %c0_i32_25] : memref<32x128xf32, #tpu.memory_space<any>> -> memref<1x128xf32, #tpu.memory_space<any>>
    %c6_i32_26 = arith.constant 6 : i32
    %c0_i32_27 = arith.constant 0 : i32
    %47 = tpu.memref_slice %arg7[%c6_i32_26, %c0_i32_27] : memref<8x128xf32, #tpu.memory_space<vmem>> -> memref<1x128xf32, #tpu.memory_space<vmem>>
    %48 = tpu.memref_slice %arg8[%c6_i32_24] : memref<16x!tpu.dma_semaphore, #tpu.memory_space<semaphore_mem>> -> memref<1x!tpu.dma_semaphore, #tpu.memory_space<semaphore_mem>>
    %49 = tpu.memref_squeeze %48 : memref<1x!tpu.dma_semaphore, #tpu.memory_space<semaphore_mem>> -> memref<!tpu.dma_semaphore, #tpu.memory_space<semaphore_mem>>
    tpu.enqueue_dma source(%46 : memref<1x128xf32, #tpu.memory_space<any>>) target(%47 : memref<1x128xf32, #tpu.memory_space<vmem>>) target_semaphore(%49 : memref<!tpu.dma_semaphore, #tpu.memory_space<semaphore_mem>>)
    %c7_i32 = arith.constant 7 : i32
    %50 = arith.addi %0, %c7_i32 : i32
    %51 = arith.index_cast %50 : i32 to index
    %52 = memref.load %arg1[%51] : memref<16xi32, #tpu.memory_space<smem>>
    %c7_i32_28 = arith.constant 7 : i32
    %c0_i32_29 = arith.constant 0 : i32
    %53 = tpu.memref_slice %arg3[%52, %c0_i32_29] : memref<32x128xf32, #tpu.memory_space<any>> -> memref<1x128xf32, #tpu.memory_space<any>>
    %c7_i32_30 = arith.constant 7 : i32
    %c0_i32_31 = arith.constant 0 : i32
    %54 = tpu.memref_slice %arg7[%c7_i32_30, %c0_i32_31] : memref<8x128xf32, #tpu.memory_space<vmem>> -> memref<1x128xf32, #tpu.memory_space<vmem>>
    %55 = tpu.memref_slice %arg8[%c7_i32_28] : memref<16x!tpu.dma_semaphore, #tpu.memory_space<semaphore_mem>> -> memref<1x!tpu.dma_semaphore, #tpu.memory_space<semaphore_mem>>
    %56 = tpu.memref_squeeze %55 : memref<1x!tpu.dma_semaphore, #tpu.memory_space<semaphore_mem>> -> memref<!tpu.dma_semaphore, #tpu.memory_space<semaphore_mem>>
    tpu.enqueue_dma source(%53 : memref<1x128xf32, #tpu.memory_space<any>>) target(%54 : memref<1x128xf32, #tpu.memory_space<vmem>>) target_semaphore(%56 : memref<!tpu.dma_semaphore, #tpu.memory_space<semaphore_mem>>)
    %c0 = arith.constant 0 : index
    %c0_32 = arith.constant 0 : index
    %57 = vector.load %arg2[%c0, %c0_32] : memref<8x1xi32, #tpu.memory_space<vmem>>, vector<8x1xi32>
    %c0_33 = arith.constant 0 : index
    %c0_34 = arith.constant 0 : index
    %58 = vector.load %arg4[%c0_33, %c0_34] : memref<2x128xf32, #tpu.memory_space<vmem>>, vector<1x128xf32>
    %59 = vector.shape_cast %58 : vector<1x128xf32> to vector<1x128xf32>
    %60 = vector.broadcast %59 : vector<1x128xf32> to vector<8x128xf32>
    %c1_i32_35 = arith.constant 1 : i32
    %61 = vector.broadcast %c1_i32_35 : i32 to vector<8x1xi32>
    %62 = arith.cmpi eq, %57, %61 : vector<8x1xi32>
    %c1 = arith.constant 1 : index
    %c0_36 = arith.constant 0 : index
    %63 = vector.load %arg4[%c1, %c0_36] : memref<2x128xf32, #tpu.memory_space<vmem>>, vector<1x128xf32>
    %64 = vector.shape_cast %62 : vector<8x1xi1> to vector<8x1xi1>
    %65 = vector.broadcast %64 : vector<8x1xi1> to vector<8x128xi1>
    %66 = vector.shape_cast %63 : vector<1x128xf32> to vector<1x128xf32>
    %67 = vector.broadcast %66 : vector<1x128xf32> to vector<8x128xf32>
    %68 = arith.select %65, %67, %60 : vector<8x128xi1>, vector<8x128xf32>
    %c0_37 = arith.constant 0 : index
    %c0_38 = arith.constant 0 : index
    %69 = vector.load %arg5[%c0_37, %c0_38] : memref<8x128xf32, #tpu.memory_space<vmem>>, vector<8x128xf32>
    %70 = arith.addf %69, %68 : vector<8x128xf32>
    %c0_39 = arith.constant 0 : index
    %c0_40 = arith.constant 0 : index
    %71 = vector.load %arg6[%c0_39, %c0_40] : memref<8x128xf32, #tpu.memory_space<vmem>>, vector<8x128xf32>
    tpu.vector_store %arg6[%c0_39, %c0_40], %70 {strides = array<i32>} : memref<8x128xf32, #tpu.memory_space<vmem>>, vector<8x128xf32>,
    %c0_i32_41 = arith.constant 0 : i32
    %c1_i32_42 = arith.constant 1 : i32
    %72 = arith.muli %c0_i32_41, %c1_i32_42 : i32
    %c0_i32_43 = arith.constant 0 : i32
    %73 = arith.addi %c0_i32_43, %72 : i32
    %c8_i32_44 = arith.constant 8 : i32
    %74 = arith.muli %73, %c8_i32_44 : i32
    %c0_i32_45 = arith.constant 0 : i32
    %75 = arith.addi %74, %c0_i32_45 : i32
    %c16_i32 = arith.constant 16 : i32
    %c0_i32_46 = arith.constant 0 : i32
    %76 = arith.cmpi eq, %c16_i32, %c0_i32_46 : i32
    %c1_i32_47 = arith.constant 1 : i32
    %77 = arith.select %76, %c1_i32_47, %c16_i32 : i32
    %78 = arith.remsi %75, %77 : i32
    %c0_i32_48 = arith.constant 0 : i32
    %79 = arith.cmpi ne, %78, %c0_i32_48 : i32
    %c0_i32_49 = arith.constant 0 : i32
    %80 = arith.cmpi slt, %78, %c0_i32_49 : i32
    %c0_i32_50 = arith.constant 0 : i32
    %81 = arith.cmpi slt, %77, %c0_i32_50 : i32
    %82 = arith.xori %80, %81 : i1
    %83 = arith.andi %82, %79 : i1
    %84 = arith.addi %78, %77 : i32
    %85 = arith.select %83, %84, %78 : i32
    %c0_i32_51 = arith.constant 0 : i32
    %c0_i32_52 = arith.constant 0 : i32
    %86 = tpu.memref_slice %arg3[%c0_i32_51, %c0_i32_52] : memref<32x128xf32, #tpu.memory_space<any>> -> memref<1x128xf32, #tpu.memory_space<any>>
    %c0_i32_53 = arith.constant 0 : i32
    %87 = tpu.memref_slice %arg7[%75, %c0_i32_53] : memref<8x128xf32, #tpu.memory_space<vmem>> -> memref<1x128xf32, #tpu.memory_space<vmem>>
    %88 = tpu.memref_slice %arg8[%85] : memref<16x!tpu.dma_semaphore, #tpu.memory_space<semaphore_mem>> -> memref<1x!tpu.dma_semaphore, #tpu.memory_space<semaphore_mem>>
    %89 = tpu.memref_squeeze %88 : memref<1x!tpu.dma_semaphore, #tpu.memory_space<semaphore_mem>> -> memref<!tpu.dma_semaphore, #tpu.memory_space<semaphore_mem>>
    tpu.wait_dma2 semaphore(%89 : memref<!tpu.dma_semaphore, #tpu.memory_space<semaphore_mem>>) src(%86 : memref<1x128xf32, #tpu.memory_space<any>>) dst(%87 : memref<1x128xf32, #tpu.memory_space<vmem>>)
    %c1_i32_54 = arith.constant 1 : i32
    %90 = arith.addi %74, %c1_i32_54 : i32
    %c16_i32_55 = arith.constant 16 : i32
    %c0_i32_56 = arith.constant 0 : i32
    %91 = arith.cmpi eq, %c16_i32_55, %c0_i32_56 : i32
    %c1_i32_57 = arith.constant 1 : i32
    %92 = arith.select %91, %c1_i32_57, %c16_i32_55 : i32
    %93 = arith.remsi %90, %92 : i32
    %c0_i32_58 = arith.constant 0 : i32
    %94 = arith.cmpi ne, %93, %c0_i32_58 : i32
    %c0_i32_59 = arith.constant 0 : i32
    %95 = arith.cmpi slt, %93, %c0_i32_59 : i32
    %c0_i32_60 = arith.constant 0 : i32
    %96 = arith.cmpi slt, %92, %c0_i32_60 : i32
    %97 = arith.xori %95, %96 : i1
    %98 = arith.andi %97, %94 : i1
    %99 = arith.addi %93, %92 : i32
    %100 = arith.select %98, %99, %93 : i32
    %c0_i32_61 = arith.constant 0 : i32
    %c0_i32_62 = arith.constant 0 : i32
    %101 = tpu.memref_slice %arg3[%c0_i32_61, %c0_i32_62] : memref<32x128xf32, #tpu.memory_space<any>> -> memref<1x128xf32, #tpu.memory_space<any>>
    %c0_i32_63 = arith.constant 0 : i32
    %102 = tpu.memref_slice %arg7[%90, %c0_i32_63] : memref<8x128xf32, #tpu.memory_space<vmem>> -> memref<1x128xf32, #tpu.memory_space<vmem>>
    %103 = tpu.memref_slice %arg8[%100] : memref<16x!tpu.dma_semaphore, #tpu.memory_space<semaphore_mem>> -> memref<1x!tpu.dma_semaphore, #tpu.memory_space<semaphore_mem>>
    %104 = tpu.memref_squeeze %103 : memref<1x!tpu.dma_semaphore, #tpu.memory_space<semaphore_mem>> -> memref<!tpu.dma_semaphore, #tpu.memory_space<semaphore_mem>>
    tpu.wait_dma2 semaphore(%104 : memref<!tpu.dma_semaphore, #tpu.memory_space<semaphore_mem>>) src(%101 : memref<1x128xf32, #tpu.memory_space<any>>) dst(%102 : memref<1x128xf32, #tpu.memory_space<vmem>>)
    %c2_i32_64 = arith.constant 2 : i32
    %105 = arith.addi %74, %c2_i32_64 : i32
    %c16_i32_65 = arith.constant 16 : i32
    %c0_i32_66 = arith.constant 0 : i32
    %106 = arith.cmpi eq, %c16_i32_65, %c0_i32_66 : i32
    %c1_i32_67 = arith.constant 1 : i32
    %107 = arith.select %106, %c1_i32_67, %c16_i32_65 : i32
    %108 = arith.remsi %105, %107 : i32
    %c0_i32_68 = arith.constant 0 : i32
    %109 = arith.cmpi ne, %108, %c0_i32_68 : i32
    %c0_i32_69 = arith.constant 0 : i32
    %110 = arith.cmpi slt, %108, %c0_i32_69 : i32
    %c0_i32_70 = arith.constant 0 : i32
    %111 = arith.cmpi slt, %107, %c0_i32_70 : i32
    %112 = arith.xori %110, %111 : i1
    %113 = arith.andi %112, %109 : i1
    %114 = arith.addi %108, %107 : i32
    %115 = arith.select %113, %114, %108 : i32
    %c0_i32_71 = arith.constant 0 : i32
    %c0_i32_72 = arith.constant 0 : i32
    %116 = tpu.memref_slice %arg3[%c0_i32_71, %c0_i32_72] : memref<32x128xf32, #tpu.memory_space<any>> -> memref<1x128xf32, #tpu.memory_space<any>>
    %c0_i32_73 = arith.constant 0 : i32
    %117 = tpu.memref_slice %arg7[%105, %c0_i32_73] : memref<8x128xf32, #tpu.memory_space<vmem>> -> memref<1x128xf32, #tpu.memory_space<vmem>>
    %118 = tpu.memref_slice %arg8[%115] : memref<16x!tpu.dma_semaphore, #tpu.memory_space<semaphore_mem>> -> memref<1x!tpu.dma_semaphore, #tpu.memory_space<semaphore_mem>>
    %119 = tpu.memref_squeeze %118 : memref<1x!tpu.dma_semaphore, #tpu.memory_space<semaphore_mem>> -> memref<!tpu.dma_semaphore, #tpu.memory_space<semaphore_mem>>
    tpu.wait_dma2 semaphore(%119 : memref<!tpu.dma_semaphore, #tpu.memory_space<semaphore_mem>>) src(%116 : memref<1x128xf32, #tpu.memory_space<any>>) dst(%117 : memref<1x128xf32, #tpu.memory_space<vmem>>)
    %c3_i32_74 = arith.constant 3 : i32
    %120 = arith.addi %74, %c3_i32_74 : i32
    %c16_i32_75 = arith.constant 16 : i32
    %c0_i32_76 = arith.constant 0 : i32
    %121 = arith.cmpi eq, %c16_i32_75, %c0_i32_76 : i32
    %c1_i32_77 = arith.constant 1 : i32
    %122 = arith.select %121, %c1_i32_77, %c16_i32_75 : i32
    %123 = arith.remsi %120, %122 : i32
    %c0_i32_78 = arith.constant 0 : i32
    %124 = arith.cmpi ne, %123, %c0_i32_78 : i32
    %c0_i32_79 = arith.constant 0 : i32
    %125 = arith.cmpi slt, %123, %c0_i32_79 : i32
    %c0_i32_80 = arith.constant 0 : i32
    %126 = arith.cmpi slt, %122, %c0_i32_80 : i32
    %127 = arith.xori %125, %126 : i1
    %128 = arith.andi %127, %124 : i1
    %129 = arith.addi %123, %122 : i32
    %130 = arith.select %128, %129, %123 : i32
    %c0_i32_81 = arith.constant 0 : i32
    %c0_i32_82 = arith.constant 0 : i32
    %131 = tpu.memref_slice %arg3[%c0_i32_81, %c0_i32_82] : memref<32x128xf32, #tpu.memory_space<any>> -> memref<1x128xf32, #tpu.memory_space<any>>
    %c0_i32_83 = arith.constant 0 : i32
    %132 = tpu.memref_slice %arg7[%120, %c0_i32_83] : memref<8x128xf32, #tpu.memory_space<vmem>> -> memref<1x128xf32, #tpu.memory_space<vmem>>
    %133 = tpu.memref_slice %arg8[%130] : memref<16x!tpu.dma_semaphore, #tpu.memory_space<semaphore_mem>> -> memref<1x!tpu.dma_semaphore, #tpu.memory_space<semaphore_mem>>
    %134 = tpu.memref_squeeze %133 : memref<1x!tpu.dma_semaphore, #tpu.memory_space<semaphore_mem>> -> memref<!tpu.dma_semaphore, #tpu.memory_space<semaphore_mem>>
    tpu.wait_dma2 semaphore(%134 : memref<!tpu.dma_semaphore, #tpu.memory_space<semaphore_mem>>) src(%131 : memref<1x128xf32, #tpu.memory_space<any>>) dst(%132 : memref<1x128xf32, #tpu.memory_space<vmem>>)
    %c4_i32_84 = arith.constant 4 : i32
    %135 = arith.addi %74, %c4_i32_84 : i32
    %c16_i32_85 = arith.constant 16 : i32
    %c0_i32_86 = arith.constant 0 : i32
    %136 = arith.cmpi eq, %c16_i32_85, %c0_i32_86 : i32
    %c1_i32_87 = arith.constant 1 : i32
    %137 = arith.select %136, %c1_i32_87, %c16_i32_85 : i32
    %138 = arith.remsi %135, %137 : i32
    %c0_i32_88 = arith.constant 0 : i32
    %139 = arith.cmpi ne, %138, %c0_i32_88 : i32
    %c0_i32_89 = arith.constant 0 : i32
    %140 = arith.cmpi slt, %138, %c0_i32_89 : i32
    %c0_i32_90 = arith.constant 0 : i32
    %141 = arith.cmpi slt, %137, %c0_i32_90 : i32
    %142 = arith.xori %140, %141 : i1
    %143 = arith.andi %142, %139 : i1
    %144 = arith.addi %138, %137 : i32
    %145 = arith.select %143, %144, %138 : i32
    %c0_i32_91 = arith.constant 0 : i32
    %c0_i32_92 = arith.constant 0 : i32
    %146 = tpu.memref_slice %arg3[%c0_i32_91, %c0_i32_92] : memref<32x128xf32, #tpu.memory_space<any>> -> memref<1x128xf32, #tpu.memory_space<any>>
    %c0_i32_93 = arith.constant 0 : i32
    %147 = tpu.memref_slice %arg7[%135, %c0_i32_93] : memref<8x128xf32, #tpu.memory_space<vmem>> -> memref<1x128xf32, #tpu.memory_space<vmem>>
    %148 = tpu.memref_slice %arg8[%145] : memref<16x!tpu.dma_semaphore, #tpu.memory_space<semaphore_mem>> -> memref<1x!tpu.dma_semaphore, #tpu.memory_space<semaphore_mem>>
    %149 = tpu.memref_squeeze %148 : memref<1x!tpu.dma_semaphore, #tpu.memory_space<semaphore_mem>> -> memref<!tpu.dma_semaphore, #tpu.memory_space<semaphore_mem>>
    tpu.wait_dma2 semaphore(%149 : memref<!tpu.dma_semaphore, #tpu.memory_space<semaphore_mem>>) src(%146 : memref<1x128xf32, #tpu.memory_space<any>>) dst(%147 : memref<1x128xf32, #tpu.memory_space<vmem>>)
    %c5_i32_94 = arith.constant 5 : i32
    %150 = arith.addi %74, %c5_i32_94 : i32
    %c16_i32_95 = arith.constant 16 : i32
    %c0_i32_96 = arith.constant 0 : i32
    %151 = arith.cmpi eq, %c16_i32_95, %c0_i32_96 : i32
    %c1_i32_97 = arith.constant 1 : i32
    %152 = arith.select %151, %c1_i32_97, %c16_i32_95 : i32
    %153 = arith.remsi %150, %152 : i32
    %c0_i32_98 = arith.constant 0 : i32
    %154 = arith.cmpi ne, %153, %c0_i32_98 : i32
    %c0_i32_99 = arith.constant 0 : i32
    %155 = arith.cmpi slt, %153, %c0_i32_99 : i32
    %c0_i32_100 = arith.constant 0 : i32
    %156 = arith.cmpi slt, %152, %c0_i32_100 : i32
    %157 = arith.xori %155, %156 : i1
    %158 = arith.andi %157, %154 : i1
    %159 = arith.addi %153, %152 : i32
    %160 = arith.select %158, %159, %153 : i32
    %c0_i32_101 = arith.constant 0 : i32
    %c0_i32_102 = arith.constant 0 : i32
    %161 = tpu.memref_slice %arg3[%c0_i32_101, %c0_i32_102] : memref<32x128xf32, #tpu.memory_space<any>> -> memref<1x128xf32, #tpu.memory_space<any>>
    %c0_i32_103 = arith.constant 0 : i32
    %162 = tpu.memref_slice %arg7[%150, %c0_i32_103] : memref<8x128xf32, #tpu.memory_space<vmem>> -> memref<1x128xf32, #tpu.memory_space<vmem>>
    %163 = tpu.memref_slice %arg8[%160] : memref<16x!tpu.dma_semaphore, #tpu.memory_space<semaphore_mem>> -> memref<1x!tpu.dma_semaphore, #tpu.memory_space<semaphore_mem>>
    %164 = tpu.memref_squeeze %163 : memref<1x!tpu.dma_semaphore, #tpu.memory_space<semaphore_mem>> -> memref<!tpu.dma_semaphore, #tpu.memory_space<semaphore_mem>>
    tpu.wait_dma2 semaphore(%164 : memref<!tpu.dma_semaphore, #tpu.memory_space<semaphore_mem>>) src(%161 : memref<1x128xf32, #tpu.memory_space<any>>) dst(%162 : memref<1x128xf32, #tpu.memory_space<vmem>>)
    %c6_i32_104 = arith.constant 6 : i32
    %165 = arith.addi %74, %c6_i32_104 : i32
    %c16_i32_105 = arith.constant 16 : i32
    %c0_i32_106 = arith.constant 0 : i32
    %166 = arith.cmpi eq, %c16_i32_105, %c0_i32_106 : i32
    %c1_i32_107 = arith.constant 1 : i32
    %167 = arith.select %166, %c1_i32_107, %c16_i32_105 : i32
    %168 = arith.remsi %165, %167 : i32
    %c0_i32_108 = arith.constant 0 : i32
    %169 = arith.cmpi ne, %168, %c0_i32_108 : i32
    %c0_i32_109 = arith.constant 0 : i32
    %170 = arith.cmpi slt, %168, %c0_i32_109 : i32
    %c0_i32_110 = arith.constant 0 : i32
    %171 = arith.cmpi slt, %167, %c0_i32_110 : i32
    %172 = arith.xori %170, %171 : i1
    %173 = arith.andi %172, %169 : i1
    %174 = arith.addi %168, %167 : i32
    %175 = arith.select %173, %174, %168 : i32
    %c0_i32_111 = arith.constant 0 : i32
    %c0_i32_112 = arith.constant 0 : i32
    %176 = tpu.memref_slice %arg3[%c0_i32_111, %c0_i32_112] : memref<32x128xf32, #tpu.memory_space<any>> -> memref<1x128xf32, #tpu.memory_space<any>>
    %c0_i32_113 = arith.constant 0 : i32
    %177 = tpu.memref_slice %arg7[%165, %c0_i32_113] : memref<8x128xf32, #tpu.memory_space<vmem>> -> memref<1x128xf32, #tpu.memory_space<vmem>>
    %178 = tpu.memref_slice %arg8[%175] : memref<16x!tpu.dma_semaphore, #tpu.memory_space<semaphore_mem>> -> memref<1x!tpu.dma_semaphore, #tpu.memory_space<semaphore_mem>>
    %179 = tpu.memref_squeeze %178 : memref<1x!tpu.dma_semaphore, #tpu.memory_space<semaphore_mem>> -> memref<!tpu.dma_semaphore, #tpu.memory_space<semaphore_mem>>
    tpu.wait_dma2 semaphore(%179 : memref<!tpu.dma_semaphore, #tpu.memory_space<semaphore_mem>>) src(%176 : memref<1x128xf32, #tpu.memory_space<any>>) dst(%177 : memref<1x128xf32, #tpu.memory_space<vmem>>)
    %c7_i32_114 = arith.constant 7 : i32
    %180 = arith.addi %74, %c7_i32_114 : i32
    %c16_i32_115 = arith.constant 16 : i32
    %c0_i32_116 = arith.constant 0 : i32
    %181 = arith.cmpi eq, %c16_i32_115, %c0_i32_116 : i32
    %c1_i32_117 = arith.constant 1 : i32
    %182 = arith.select %181, %c1_i32_117, %c16_i32_115 : i32
    %183 = arith.remsi %180, %182 : i32
    %c0_i32_118 = arith.constant 0 : i32
    %184 = arith.cmpi ne, %183, %c0_i32_118 : i32
    %c0_i32_119 = arith.constant 0 : i32
    %185 = arith.cmpi slt, %183, %c0_i32_119 : i32
    %c0_i32_120 = arith.constant 0 : i32
    %186 = arith.cmpi slt, %182, %c0_i32_120 : i32
    %187 = arith.xori %185, %186 : i1
    %188 = arith.andi %187, %184 : i1
    %189 = arith.addi %183, %182 : i32
    %190 = arith.select %188, %189, %183 : i32
    %c0_i32_121 = arith.constant 0 : i32
    %c0_i32_122 = arith.constant 0 : i32
    %191 = tpu.memref_slice %arg3[%c0_i32_121, %c0_i32_122] : memref<32x128xf32, #tpu.memory_space<any>> -> memref<1x128xf32, #tpu.memory_space<any>>
    %c0_i32_123 = arith.constant 0 : i32
    %192 = tpu.memref_slice %arg7[%180, %c0_i32_123] : memref<8x128xf32, #tpu.memory_space<vmem>> -> memref<1x128xf32, #tpu.memory_space<vmem>>
    %193 = tpu.memref_slice %arg8[%190] : memref<16x!tpu.dma_semaphore, #tpu.memory_space<semaphore_mem>> -> memref<1x!tpu.dma_semaphore, #tpu.memory_space<semaphore_mem>>
    %194 = tpu.memref_squeeze %193 : memref<1x!tpu.dma_semaphore, #tpu.memory_space<semaphore_mem>> -> memref<!tpu.dma_semaphore, #tpu.memory_space<semaphore_mem>>
    tpu.wait_dma2 semaphore(%194 : memref<!tpu.dma_semaphore, #tpu.memory_space<semaphore_mem>>) src(%191 : memref<1x128xf32, #tpu.memory_space<any>>) dst(%192 : memref<1x128xf32, #tpu.memory_space<vmem>>)
    %195 = tpu.assume_multiple %74, 8 : i32
    %196 = arith.index_cast %195 : i32 to index
    %c0_124 = arith.constant 0 : index
    %197 = vector.load %arg6[%196, %c0_124] : memref<8x128xf32, #tpu.memory_space<vmem>>, vector<8x128xf32>
    %198 = arith.index_cast %195 : i32 to index
    %c0_125 = arith.constant 0 : index
    %199 = vector.load %arg7[%198, %c0_125] : memref<8x128xf32, #tpu.memory_space<vmem>>, vector<8x128xf32>
    %200 = arith.addf %197, %199 : vector<8x128xf32>
    %201 = arith.index_cast %195 : i32 to index
    %c0_126 = arith.constant 0 : index
    %202 = vector.load %arg6[%201, %c0_126] : memref<8x128xf32, #tpu.memory_space<vmem>>, vector<8x128xf32>
    tpu.vector_store %arg6[%201, %c0_126], %200 {strides = array<i32>} : memref<8x128xf32, #tpu.memory_space<vmem>>, vector<8x128xf32>,
    %c1_i32_127 = arith.constant 1 : i32
    return
  }
  func.func @transform_0(%arg0: i32, %arg1: memref<16xi32, #tpu.memory_space<smem>>) -> (i32, i32) {
    %c0_i32 = arith.constant 0 : i32
    %c0_i32_0 = arith.constant 0 : i32
    return %arg0, %c0_i32 : i32, i32
  }
  func.func @transform_2(%arg0: i32, %arg1: memref<16xi32, #tpu.memory_space<smem>>) -> (i32, i32) {
    %c0_i32 = arith.constant 0 : i32
    %c0_i32_0 = arith.constant 0 : i32
    %c0_i32_1 = arith.constant 0 : i32
    return %c0_i32, %c0_i32_0 : i32, i32
  }
  func.func @transform_3(%arg0: i32, %arg1: memref<16xi32, #tpu.memory_space<smem>>) -> (i32, i32) {
    %c0_i32 = arith.constant 0 : i32
    %c0_i32_0 = arith.constant 0 : i32
    %c0_i32_1 = arith.constant 0 : i32
    return %c0_i32, %c0_i32_0 : i32, i32
  }
  func.func @transform_4(%arg0: i32, %arg1: memref<16xi32, #tpu.memory_space<smem>>) -> (i32, i32) {
    %c0_i32 = arith.constant 0 : i32
    %c0_i32_0 = arith.constant 0 : i32
    return %arg0, %c0_i32 : i32, i32
  }
}

</mosaic_0001>

<llo_original>
// kernel: tpu_custom_call.1
$region0: #{tpu_custom_call.1}
  #allocation0 [shape = 'u32[]', space=smem, size = 0x4, offset = 0x4, fixed_abs, tag = 'smem constant byte address 0x4 - core index']
  #allocation1 [shape = 'u32[72,128]{1,0:T(1,128)}', space=vmem, size = 0x9000, scoped, tag = 'internal scratch']
  #allocation2 [shape = 'f32[8,128]{1,0:T(8,128)}', space=vmem, size = 0x1000, scoped, tag = 'scratch operand']
  #allocation3 [shape = 's32[16]{0}', space=sflag, size = 0x40, scoped, tag = 'scratch operand']
  #allocation4 [shape = 's32[1]{0}', space=sflag, size = 0x4, scoped, tag = 'scoped memory for tpu_custom_call.1']
  #allocation5 [shape = 'u8[512]{0}', space=smem, size = 0x200, scoped, tag = 'prefetched SMEM operand 0']
  #allocation8 [shape = 's32[]', space=sflag, size = 0x4, offset = 0, fixed_abs, tag = 'sflag constant byte address 0x0 - dummy sync flag']
  #allocation9 [shape = 's32[]', space=sflag, size = 0x4, offset = 0, fixed_abs, tag = 'sflag constant byte address 0x0 - dummy sync flag']
  #allocation10 [shape = 'u32[]', space=smem, size = 0x4, offset = 0x44, fixed_abs, tag = 'smem constant byte address 0x44 - assertion arg 0']
  #allocation11 [shape = 'u32[]', space=smem, size = 0x4, offset = 0x48, fixed_abs, tag = 'smem constant byte address 0x48 - assertion arg 1']
  #allocation12 [shape = 's32[]', space=sflag, size = 0x4, offset = 0, fixed_abs, tag = 'sflag constant byte address 0x0 - dummy sync flag']
  #allocation13 [shape = 's32[]', space=sflag, size = 0x4, offset = 0, fixed_abs, tag = 'sflag constant byte address 0x0 - dummy sync flag']
  #allocation14 [shape = 's32[]', space=sflag, size = 0x4, offset = 0, fixed_abs, tag = 'sflag constant byte address 0x0 - dummy sync flag']
  #allocation15 [shape = 's32[]', space=sflag, size = 0x4, offset = 0, fixed_abs, tag = 'sflag constant byte address 0x0 - dummy sync flag']
  #allocation16 [shape = 's32[]', space=sflag, size = 0x4, offset = 0, fixed_abs, tag = 'sflag constant byte address 0x0 - dummy sync flag']
  #allocation17 [shape = 's32[]', space=sflag, size = 0x4, offset = 0, fixed_abs, tag = 'sflag constant byte address 0x0 - dummy sync flag']
  #allocation18 [shape = 's32[]', space=sflag, size = 0x4, offset = 0, fixed_abs, tag = 'sflag constant byte address 0x0 - dummy sync flag']
  #allocation19 [shape = 's32[]', space=sflag, size = 0x4, offset = 0, fixed_abs, tag = 'sflag constant byte address 0x0 - dummy sync flag']
  #allocation20 [shape = 's32[]', space=sflag, size = 0x4, offset = 0, fixed_abs, tag = 'sflag constant byte address 0x0 - dummy sync flag']
  #allocation21 [shape = 's32[]', space=sflag, size = 0x4, offset = 0, fixed_abs, tag = 'sflag constant byte address 0x0 - dummy sync flag']
  #allocation22 [shape = 's32[]', space=sflag, size = 0x4, offset = 0, fixed_abs, tag = 'sflag constant byte address 0x0 - dummy sync flag']
  #allocation23 [shape = 's32[]', space=sflag, size = 0x4, offset = 0, fixed_abs, tag = 'sflag constant byte address 0x0 - dummy sync flag']
  #allocation24 [shape = 's32[]', space=sflag, size = 0x4, offset = 0, fixed_abs, tag = 'sflag constant byte address 0x0 - dummy sync flag']
  #allocation25 [shape = 's32[]', space=sflag, size = 0x4, offset = 0, fixed_abs, tag = 'sflag constant byte address 0x0 - dummy sync flag']
  %s0 = inlined_call_operand.vmem [shape: s32[16], index: 0, kind: input, shape index: {}]
  %s1 = inlined_call_operand.vmem [shape: s32[16,1], index: 1, kind: input, shape index: {}]
  %s2 = inlined_call_operand.hbm [shape: f32[32,128], index: 2, kind: input, shape index: {}]
  %s3 = inlined_call_operand.vmem [shape: f32[2,128], index: 3, kind: input, shape index: {}]
  %s4 = inlined_call_operand.vmem [shape: f32[8,128], index: 4, kind: input, shape index: {}]
  %s5 = inlined_call_operand.hbm [shape: f32[16,128], index: 5, kind: output, shape index: {}]
  %s6 = sld [smem:[#allocation0]]
  $region77: #{tpu_custom_call.1} parent=0
    _
  %s8 = ssub.s32 1, %s6
  %s9 = scalar_select 0, %s8, %s6
  %s11 = sshll.u32 %s0, 4
  %s12 = int_to_ptr.vmem [resolvable:$true] %s11
  %14 = dma.vmem_to_smem %s12, 16, [#allocation5], [#allocation4]
  %16 = dma.done [#allocation4], 16
  %17 = sfence
  $region1: #{tpu_custom_call.1} parent=0
    #allocation6 [shape = 'u8[8192]{0}', space=vmem, size = 0x2000, scoped, tag = 'output window, operand 0']
    #allocation7 [shape = 's32[2]{0}', space=sflag, size = 0x8, scoped, tag = 'scoped memory for tpu_custom_call.1']
    %18 = vsyncpa [#allocation7], 0
    %s19 = scalar_lea.sflag [#allocation7], 1
    %20 = vsyncpa %s19, 0
    loop: start=0, step=1, limit=4
    $region2: #{tpu_custom_call.1} parent=1 // loop_pre_header
      _
    $region3: #{tpu_custom_call.1} parent=1 // loop_header
      %s22 = sphi 0, %s26
      %p23 = scmp.ge.s32.totalorder %s22, 4
      %s32 = sphi 0, %s34
      %s35 = sphi 0, %s32
      %s36 = sphi 0, %s35
      %s52 = sphi 0, %s36
      %s56 = sphi 0, %s56
      %s58 = sphi 0, %s56
      %s59 = sphi 0, %s58
      %s73 = sphi 0, %s59
      %s77 = sphi 0, %s77
      %s79 = sphi 0, %s77
      %s80 = sphi 0, %s79
      %s94 = sphi 0, %s80
      %s100 = sphi 0, %s102
      %s103 = sphi 0, %s100
      %s104 = sphi 0, %s103
      %s120 = sphi 0, %s104
    $region4: #{tpu_custom_call.1} parent=1 // loop_header_branch
      %25 = sbr.rel (%p23) target = $region8
    $region5: #{tpu_custom_call.1} parent=1 // loop_body
      %s27 = ssub.s32 %s22, 1
      %s28 = ssub.s32 %s22, 2
      %s29 = sadd.s32 %s22, 1
      %s30 = ssub.s32 %s22, %s29
      %p31 = scmp.eq.s32.totalorder %s30, 0
      %s33 = sadd.s32 %s32, 1
      %s34 = scalar_select %p31, %s32, %s33
      %p37 = pneg %p31
      %p38 = scmp.eq.s32.totalorder %s22, 1
      %p39 = por %p37, %p38
      %p40 = scmp.ne.s32.totalorder %s32, %s35
      %p41 = scmp.eq.s32.totalorder %s22, 0
      %p42 = por %p40, %p41
      %p43 = scmp.ne.s32.totalorder %s32, %s35
      %p44 = scmp.eq.s32.totalorder %s27, 1
      %p45 = por %p43, %p44
      %p46 = scmp.ne.s32.totalorder %s35, %s36
      %p47 = scmp.eq.s32.totalorder %s27, 0
      %p48 = por %p46, %p47
      %p49 = scmp.ne.s32.totalorder %s35, %s36
      %p50 = scmp.eq.s32.totalorder %s28, 1
      %p51 = por %p49, %p50
      %p53 = scmp.ne.s32.totalorder %s36, %s52
      %p54 = scmp.eq.s32.totalorder %s28, 0
      %p55 = por %p53, %p54
      %s57 = sadd.s32 %s56, 1
      %p60 = scmp.eq.s32.totalorder %s22, 1
      %p61 = scmp.ne.s32.totalorder %s56, %s58
      %p62 = scmp.eq.s32.totalorder %s22, 0
      %p63 = por %p61, %p62
      %p64 = scmp.ne.s32.totalorder %s56, %s58
      %p65 = scmp.eq.s32.totalorder %s27, 1
      %p66 = por %p64, %p65
      %p67 = scmp.ne.s32.totalorder %s58, %s59
      %p68 = scmp.eq.s32.totalorder %s27, 0
      %p69 = por %p67, %p68
      %p70 = scmp.ne.s32.totalorder %s58, %s59
      %p71 = scmp.eq.s32.totalorder %s28, 1
      %p72 = por %p70, %p71
      %p74 = scmp.ne.s32.totalorder %s59, %s73
      %p75 = scmp.eq.s32.totalorder %s28, 0
      %p76 = por %p74, %p75
      %s78 = sadd.s32 %s77, 1
      %p81 = scmp.eq.s32.totalorder %s22, 1
      %p82 = scmp.ne.s32.totalorder %s77, %s79
      %p83 = scmp.eq.s32.totalorder %s22, 0
      %p84 = por %p82, %p83
      %p85 = scmp.ne.s32.totalorder %s77, %s79
      %p86 = scmp.eq.s32.totalorder %s27, 1
      %p87 = por %p85, %p86
      %p88 = scmp.ne.s32.totalorder %s79, %s80
      %p89 = scmp.eq.s32.totalorder %s27, 0
      %p90 = por %p88, %p89
      %p91 = scmp.ne.s32.totalorder %s79, %s80
      %p92 = scmp.eq.s32.totalorder %s28, 1
      %p93 = por %p91, %p92
      %p95 = scmp.ne.s32.totalorder %s80, %s94
      %p96 = scmp.eq.s32.totalorder %s28, 0
      %p97 = por %p95, %p96
      %s98 = ssub.s32 %s22, %s29
      %p99 = scmp.eq.s32.totalorder %s98, 0
      %s101 = sadd.s32 %s100, 1
      %s102 = scalar_select %p99, %s100, %s101
      %p105 = pneg %p99
      %p106 = scmp.eq.s32.totalorder %s22, 1
      %p107 = por %p105, %p106
      %p108 = scmp.ne.s32.totalorder %s100, %s103
      %p109 = scmp.eq.s32.totalorder %s22, 0
      %p110 = por %p108, %p109
      %p111 = scmp.ne.s32.totalorder %s100, %s103
      %p112 = scmp.eq.s32.totalorder %s27, 1
      %p113 = por %p111, %p112
      %p114 = scmp.ne.s32.totalorder %s103, %s104
      %p115 = scmp.eq.s32.totalorder %s27, 0
      %p116 = por %p114, %p115
      %p117 = scmp.ne.s32.totalorder %s103, %s104
      %p118 = scmp.eq.s32.totalorder %s28, 1
      %p119 = por %p117, %p118
      %p121 = scmp.ne.s32.totalorder %s104, %s120
      %p122 = scmp.eq.s32.totalorder %s28, 0
      %p123 = por %p121, %p122
      %p124 = scmp.le.s32.totalorder 1, %s22
      %p125 = scmp.lt.s32.totalorder %s22, 3
      %p126 = pnand %p124, %p125
      %p127 = pneg %p126
      // Predicated region
      $region9: #{tpu_custom_call.1} parent=5 // pred_check
        _
      $region10: #{tpu_custom_call.1} parent=5 // pred_check_branch
        %129 = sbr.rel (%p126) target = $region12
      $region11: #{tpu_custom_call.1} parent=5 // pred_region
        %s130 = ssub.s32 %s22, 1
        // Predicated region
        $region13: #{tpu_custom_call.1} parent=11 // pred_check
          %p131 = pneg %p69
        $region14: #{tpu_custom_call.1} parent=11 // pred_check_branch
          %133 = sbr.rel (%p131) target = $region16
        $region15: #{tpu_custom_call.1} parent=11 // pred_region
          _
        $region16: #{tpu_custom_call.1} parent=11 // pred_fallthru
          _
        // Predicated region
        $region17: #{tpu_custom_call.1} parent=11 // pred_check
          %p134 = pneg %p90
        $region18: #{tpu_custom_call.1} parent=11 // pred_check_branch
          %136 = sbr.rel (%p134) target = $region20
        $region19: #{tpu_custom_call.1} parent=11 // pred_region
          _
        $region20: #{tpu_custom_call.1} parent=11 // pred_fallthru
          _
      $region12: #{tpu_custom_call.1} parent=5 // pred_fallthru
        _
      %p137 = scmp.lt.s32.totalorder %s22, 2
      // Predicated region
      $region21: #{tpu_custom_call.1} parent=5 // pred_check
        %p138 = pneg %p137
      $region22: #{tpu_custom_call.1} parent=5 // pred_check_branch
        %140 = sbr.rel (%p138) target = $region24
      $region23: #{tpu_custom_call.1} parent=5 // pred_region
        // Predicated region
        $region25: #{tpu_custom_call.1} parent=23 // pred_check
          %p141 = pneg %p42
        $region26: #{tpu_custom_call.1} parent=23 // pred_check_branch
          %143 = sbr.rel (%p141) target = $region28
        $region27: #{tpu_custom_call.1} parent=23 // pred_region
          %p144 = scmp.lt.s32.totalorder %s22, 1
          %s145 = scalar_select %p144, %s22, 1
          %s146 = smul.addr %s145, 8
          %s147 = scalar_lea.vmem %s1, %s146
        $region28: #{tpu_custom_call.1} parent=23 // pred_fallthru
          _
      $region24: #{tpu_custom_call.1} parent=5 // pred_fallthru
        _
      %p148 = scmp.le.s32.totalorder 1, %s22
      %p149 = scmp.lt.s32.totalorder %s22, 3
      %p150 = pnand %p148, %p149
      %p151 = pneg %p150
      // Predicated region
      $region29: #{tpu_custom_call.1} parent=5 // pred_check
        _
      $region30: #{tpu_custom_call.1} parent=5 // pred_check_branch
        %153 = sbr.rel (%p150) target = $region32
      $region31: #{tpu_custom_call.1} parent=5 // pred_region
        %s154 = ssub.s32 %s22, 1
        %p155 = scmp.lt.s32.totalorder %s27, 1
        %s156 = scalar_select %p155, %s27, 1
        %s157 = smul.addr %s156, 8
        %s158 = scalar_lea.vmem %s1, %s157
        %p159 = pneg %p48
        %p160 = pneg %p45
        %p161 = pneg %p69
        %p162 = pneg %p66
        %p163 = pneg %p90
        %p164 = pneg %p87
        %p165 = pneg %p116
        %p166 = pneg %p113
        %s167 = sand.u32 %s103, 1
        %s168 = scalar_lea.sflag [#allocation7], %s167
        %s169 = sand.u32 %s103, 1
        %s170 = smul.addr %s169, 8
        %s171 = scalar_lea.vmem [#allocation6], %s170
        %p172 = scmp.lt.s32.totalorder %s27, 1
        %s173 = scalar_select %p172, %s27, 1
        %s174 = smul.addr %s173, 8
        %s175 = scalar_lea.vmem %s1, %s174
        %s176 = smul.u32 %s27, 8
        %s177 = sld [smem:[#allocation5 + %s176]]
        %s178 = scalar_lea.hbm %s2, %s177
        // Predicated region
        $region33: #{tpu_custom_call.1} parent=31 // pred_check
          _
        $region34: #{tpu_custom_call.1} parent=31 // pred_check_branch
          %180 = sbr.rel target = $region36
        $region35: #{tpu_custom_call.1} parent=31 // pred_region
          %181 = sst [smem:[#allocation10]] [#allocation9]
          %182 = sst [smem:[#allocation11]] [#allocation8]
        $region36: #{tpu_custom_call.1} parent=31 // pred_fallthru
          _
        %184 = shalt.err (0)
        %s186 = sshll.u32 %s178, 4
        %s187 = int_to_ptr.hbm [resolvable:$true] %s186
        %s188 = sshll.u32 [#allocation2], 4
        %s189 = int_to_ptr.vmem [resolvable:$true] %s188
        %191 = dma.hbm_to_vmem [thread:$0]  %s187, 16, %s189, [#allocation3]
        %s192 = sadd.s32 %s176, 1
        %s193 = sld [smem:[#allocation5 + %s192]]
        %s194 = scalar_lea.hbm %s2, %s193
        %s195 = scalar_lea.vmem [#allocation2], 1
        %s196 = scalar_lea.sflag [#allocation3], 1
        // Predicated region
        $region37: #{tpu_custom_call.1} parent=31 // pred_check
          _
        $region38: #{tpu_custom_call.1} parent=31 // pred_check_branch
          %198 = sbr.rel target = $region40
        $region39: #{tpu_custom_call.1} parent=31 // pred_region
          %199 = sst [smem:[#allocation10]] [#allocation13]
          %200 = sst [smem:[#allocation11]] [#allocation12]
        $region40: #{tpu_custom_call.1} parent=31 // pred_fallthru
          _
        %202 = shalt.err (0)
        %s204 = sshll.u32 %s194, 4
        %s205 = int_to_ptr.hbm [resolvable:$true] %s204
        %s206 = sshll.u32 %s195, 4
        %s207 = int_to_ptr.vmem [resolvable:$true] %s206
        %209 = dma.hbm_to_vmem [thread:$0]  %s205, 16, %s207, %s196
        %s210 = sadd.s32 %s176, 2
        %s211 = sld [smem:[#allocation5 + %s210]]
        %s212 = scalar_lea.hbm %s2, %s211
        %s213 = scalar_lea.vmem [#allocation2], 2
        %s214 = scalar_lea.sflag [#allocation3], 2
        // Predicated region
        $region41: #{tpu_custom_call.1} parent=31 // pred_check
          _
        $region42: #{tpu_custom_call.1} parent=31 // pred_check_branch
          %216 = sbr.rel target = $region44
        $region43: #{tpu_custom_call.1} parent=31 // pred_region
          %217 = sst [smem:[#allocation10]] [#allocation15]
          %218 = sst [smem:[#allocation11]] [#allocation14]
        $region44: #{tpu_custom_call.1} parent=31 // pred_fallthru
          _
        %220 = shalt.err (0)
        %s222 = sshll.u32 %s212, 4
        %s223 = int_to_ptr.hbm [resolvable:$true] %s222
        %s224 = sshll.u32 %s213, 4
        %s225 = int_to_ptr.vmem [resolvable:$true] %s224
        %227 = dma.hbm_to_vmem [thread:$0]  %s223, 16, %s225, %s214
        %s228 = sadd.s32 %s176, 3
        %s229 = sld [smem:[#allocation5 + %s228]]
        %s230 = scalar_lea.hbm %s2, %s229
        %s231 = scalar_lea.vmem [#allocation2], 3
        %s232 = scalar_lea.sflag [#allocation3], 3
        // Predicated region
        $region45: #{tpu_custom_call.1} parent=31 // pred_check
          _
        $region46: #{tpu_custom_call.1} parent=31 // pred_check_branch
          %234 = sbr.rel target = $region48
        $region47: #{tpu_custom_call.1} parent=31 // pred_region
          %235 = sst [smem:[#allocation10]] [#allocation17]
          %236 = sst [smem:[#allocation11]] [#allocation16]
        $region48: #{tpu_custom_call.1} parent=31 // pred_fallthru
          _
        %238 = shalt.err (0)
        %s240 = sshll.u32 %s230, 4
        %s241 = int_to_ptr.hbm [resolvable:$true] %s240
        %s242 = sshll.u32 %s231, 4
        %s243 = int_to_ptr.vmem [resolvable:$true] %s242
        %245 = dma.hbm_to_vmem [thread:$0]  %s241, 16, %s243, %s232
        %s246 = sadd.s32 %s176, 4
        %s247 = sld [smem:[#allocation5 + %s246]]
        %s248 = scalar_lea.hbm %s2, %s247
        %s249 = scalar_lea.vmem [#allocation2], 4
        %s250 = scalar_lea.sflag [#allocation3], 4
        // Predicated region
        $region49: #{tpu_custom_call.1} parent=31 // pred_check
          _
        $region50: #{tpu_custom_call.1} parent=31 // pred_check_branch
          %252 = sbr.rel target = $region52
        $region51: #{tpu_custom_call.1} parent=31 // pred_region
          %253 = sst [smem:[#allocation10]] [#allocation19]
          %254 = sst [smem:[#allocation11]] [#allocation18]
        $region52: #{tpu_custom_call.1} parent=31 // pred_fallthru
          _
        %256 = shalt.err (0)
        %s258 = sshll.u32 %s248, 4
        %s259 = int_to_ptr.hbm [resolvable:$true] %s258
        %s260 = sshll.u32 %s249, 4
        %s261 = int_to_ptr.vmem [resolvable:$true] %s260
        %263 = dma.hbm_to_vmem [thread:$0]  %s259, 16, %s261, %s250
        %s264 = sadd.s32 %s176, 5
        %s265 = sld [smem:[#allocation5 + %s264]]
        %s266 = scalar_lea.hbm %s2, %s265
        %s267 = scalar_lea.vmem [#allocation2], 5
        %s268 = scalar_lea.sflag [#allocation3], 5
        // Predicated region
        $region53: #{tpu_custom_call.1} parent=31 // pred_check
          _
        $region54: #{tpu_custom_call.1} parent=31 // pred_check_branch
          %270 = sbr.rel target = $region56
        $region55: #{tpu_custom_call.1} parent=31 // pred_region
          %271 = sst [smem:[#allocation10]] [#allocation21]
          %272 = sst [smem:[#allocation11]] [#allocation20]
        $region56: #{tpu_custom_call.1} parent=31 // pred_fallthru
          _
        %274 = shalt.err (0)
        %s276 = sshll.u32 %s266, 4
        %s277 = int_to_ptr.hbm [resolvable:$true] %s276
        %s278 = sshll.u32 %s267, 4
        %s279 = int_to_ptr.vmem [resolvable:$true] %s278
        %281 = dma.hbm_to_vmem [thread:$0]  %s277, 16, %s279, %s268
        %s282 = sadd.s32 %s176, 6
        %s283 = sld [smem:[#allocation5 + %s282]]
        %s284 = scalar_lea.hbm %s2, %s283
        %s285 = scalar_lea.vmem [#allocation2], 6
        %s286 = scalar_lea.sflag [#allocation3], 6
        // Predicated region
        $region57: #{tpu_custom_call.1} parent=31 // pred_check
          _
        $region58: #{tpu_custom_call.1} parent=31 // pred_check_branch
          %288 = sbr.rel target = $region60
        $region59: #{tpu_custom_call.1} parent=31 // pred_region
          %289 = sst [smem:[#allocation10]] [#allocation23]
          %290 = sst [smem:[#allocation11]] [#allocation22]
        $region60: #{tpu_custom_call.1} parent=31 // pred_fallthru
          _
        %292 = shalt.err (0)
        %s294 = sshll.u32 %s284, 4
        %s295 = int_to_ptr.hbm [resolvable:$true] %s294
        %s296 = sshll.u32 %s285, 4
        %s297 = int_to_ptr.vmem [resolvable:$true] %s296
        %299 = dma.hbm_to_vmem [thread:$0]  %s295, 16, %s297, %s286
        %s300 = sadd.s32 %s176, 7
        %s301 = sld [smem:[#allocation5 + %s300]]
        %s302 = scalar_lea.hbm %s2, %s301
        %s303 = scalar_lea.vmem [#allocation2], 7
        %s304 = scalar_lea.sflag [#allocation3], 7
        // Predicated region
        $region61: #{tpu_custom_call.1} parent=31 // pred_check
          _
        $region62: #{tpu_custom_call.1} parent=31 // pred_check_branch
          %306 = sbr.rel target = $region64
        $region63: #{tpu_custom_call.1} parent=31 // pred_region
          %307 = sst [smem:[#allocation10]] [#allocation25]
          %308 = sst [smem:[#allocation11]] [#allocation24]
        $region64: #{tpu_custom_call.1} parent=31 // pred_fallthru
          _
        %310 = shalt.err (0)
        %s312 = sshll.u32 %s302, 4
        %s313 = int_to_ptr.hbm [resolvable:$true] %s312
        %s314 = sshll.u32 %s303, 4
        %s315 = int_to_ptr.vmem [resolvable:$true] %s314
        %317 = dma.hbm_to_vmem [thread:$0]  %s313, 16, %s315, %s304
        %v318 = vld [vmem:[%s175] sm:$0xff]
        %v319 = vld [vmem:[%s3] sm:$0x1]
        %v320 = vperm.slane %v319, 0
        %vm321 = vcmp.eq.s32.totalorder %v318, 1
        %v322 = vld [vmem:[%s3 + $0x1] sm:$0x1]
        %v323 = vsel %vm321, 1, 0
        %324 = vset.pattern.permute.xlu0 0
        %325 = vperm.xlu0 %324, %v323
        %v326 = vpop.permute.xlu0 %325
        %vm327 = vcmp.eq.s32.totalorder %v326, 1
        %v328 = vperm.slane %v322, 0
        %v329 = vsel %vm327, %v328, %v320
        %v330 = vld [vmem:[%s4] sm:$0xff]
        %v331 = vadd.f32 %v330, %v329
        %332 = vst [vmem:[%s171] sm:$0xff] %v331
        %s333 = smul.u32 1, 1
        %s334 = sshll.u32 %s333, 4
        %335 = dma.done [#allocation3], %s334
        %s336 = sshll.u32 %s333, 4
        %337 = dma.done %s196, %s336
        %s338 = sshll.u32 %s333, 4
        %339 = dma.done %s214, %s338
        %s340 = sshll.u32 %s333, 4
        %341 = dma.done %s232, %s340
        %s342 = sshll.u32 %s333, 4
        %343 = dma.done %s250, %s342
        %s344 = sshll.u32 %s333, 4
        %345 = dma.done %s268, %s344
        %s346 = sshll.u32 %s333, 4
        %347 = dma.done %s286, %s346
        %s348 = sshll.u32 %s333, 4
        %349 = dma.done %s304, %s348
        %v350 = vld [vmem:[%s171] sm:$0xff]
        %v351 = vld [vmem:[#allocation2] sm:$0xff]
        %v352 = vadd.f32 %v350, %v351
        %353 = vst [vmem:[%s171] sm:$0xff] %v352
        %s354 = sand.u32 %s103, 1
        %s355 = scalar_lea.sflag [#allocation7], %s354
        %s356 = sand.u32 %s103, 1
        %s357 = smul.addr %s356, 8
        %s358 = scalar_lea.vmem [#allocation6], %s357
        // Predicated region
        $region65: #{tpu_custom_call.1} parent=31 // pred_check
          %p359 = pneg %p113
        $region66: #{tpu_custom_call.1} parent=31 // pred_check_branch
          %361 = sbr.rel (%p359) target = $region68
        $region67: #{tpu_custom_call.1} parent=31 // pred_region
          %363 = vsyncadd %s355, 0
          %s364 = smul.addr %s27, 8
          %s365 = scalar_lea.hbm %s5, %s364
          %s367 = sshll.u32 %s358, 4
          %s368 = int_to_ptr.vmem [resolvable:$true] %s367
          %s369 = sshll.u32 %s365, 4
          %s370 = int_to_ptr.hbm [resolvable:$true] %s369
          %372 = dma.vmem_to_hbm [thread:$0]  %s368, 128, %s370, %s355
        $region68: #{tpu_custom_call.1} parent=31 // pred_fallthru
          _
      $region32: #{tpu_custom_call.1} parent=5 // pred_fallthru
        _
      %p373 = scmp.le.s32.totalorder 2, %s22
      // Predicated region
      $region69: #{tpu_custom_call.1} parent=5 // pred_check
        %p374 = pneg %p373
      $region70: #{tpu_custom_call.1} parent=5 // pred_check_branch
        %376 = sbr.rel (%p374) target = $region72
      $region71: #{tpu_custom_call.1} parent=5 // pred_region
        %s377 = ssub.s32 %s22, 2
        // Predicated region
        $region73: #{tpu_custom_call.1} parent=71 // pred_check
          %p378 = pneg %p119
        $region74: #{tpu_custom_call.1} parent=71 // pred_check_branch
          %380 = sbr.rel (%p378) target = $region76
        $region75: #{tpu_custom_call.1} parent=71 // pred_region
          %s381 = sand.u32 %s104, 1
          %s382 = scalar_lea.sflag [#allocation7], %s381
          %s383 = sand.u32 %s104, 1
          %s384 = smul.addr %s383, 8
          %s385 = scalar_lea.vmem [#allocation6], %s384
          %387 = dma.done %s382, 128
        $region76: #{tpu_custom_call.1} parent=71 // pred_fallthru
          _
      $region72: #{tpu_custom_call.1} parent=5 // pred_fallthru
        _
    $region6: #{tpu_custom_call.1} parent=1 // loop_footer
      %s26 = sadd.s32 1, %s22
    $region7: #{tpu_custom_call.1} parent=1 // loop_footer_branch
      %21 = sbr.rel target = $region3
    $region8: #{tpu_custom_call.1} parent=1 // loop_exit
      _
    %388 = vsyncpa [#allocation7], 1
    %s389 = scalar_lea.sflag [#allocation7], 1
    %390 = vsyncpa %s389, 1
  %391 = vsyncmov [#allocation3]
  %s392 = vpop.sfrf %391
  %p393 = scmp.eq.s32.totalorder %s392, 0
  %p394 = pneg %p393
  %396 = shalt.err (%p394)
  %s397 = scalar_lea.sflag [#allocation3], 1
  %398 = vsyncmov %s397
  %s399 = vpop.sfrf %398
  %p400 = scmp.eq.s32.totalorder %s399, 0
  %p401 = pneg %p400
  %403 = shalt.err (%p401)
  %s404 = scalar_lea.sflag [#allocation3], 2
  %405 = vsyncmov %s404
  %s406 = vpop.sfrf %405
  %p407 = scmp.eq.s32.totalorder %s406, 0
  %p408 = pneg %p407
  %410 = shalt.err (%p408)
  %s411 = scalar_lea.sflag [#allocation3], 3
  %412 = vsyncmov %s411
  %s413 = vpop.sfrf %412
  %p414 = scmp.eq.s32.totalorder %s413, 0
  %p415 = pneg %p414
  %417 = shalt.err (%p415)
  %s418 = scalar_lea.sflag [#allocation3], 4
  %419 = vsyncmov %s418
  %s420 = vpop.sfrf %419
  %p421 = scmp.eq.s32.totalorder %s420, 0
  %p422 = pneg %p421
  %424 = shalt.err (%p422)
  %s425 = scalar_lea.sflag [#allocation3], 5
  %426 = vsyncmov %s425
  %s427 = vpop.sfrf %426
  %p428 = scmp.eq.s32.totalorder %s427, 0
  %p429 = pneg %p428
  %431 = shalt.err (%p429)
  %s432 = scalar_lea.sflag [#allocation3], 6
  %433 = vsyncmov %s432
  %s434 = vpop.sfrf %433
  %p435 = scmp.eq.s32.totalorder %s434, 0
  %p436 = pneg %p435
  %438 = shalt.err (%p436)
  %s439 = scalar_lea.sflag [#allocation3], 7
  %440 = vsyncmov %s439
  %s441 = vpop.sfrf %440
  %p442 = scmp.eq.s32.totalorder %s441, 0
  %p443 = pneg %p442
  %445 = shalt.err (%p443)
  %s446 = scalar_lea.sflag [#allocation3], 8
  %447 = vsyncmov %s446
  %s448 = vpop.sfrf %447
  %p449 = scmp.eq.s32.totalorder %s448, 0
  %p450 = pneg %p449
  %452 = shalt.err (%p450)
  %s453 = scalar_lea.sflag [#allocation3], 9
  %454 = vsyncmov %s453
  %s455 = vpop.sfrf %454
  %p456 = scmp.eq.s32.totalorder %s455, 0
  %p457 = pneg %p456
  %459 = shalt.err (%p457)
  %s460 = scalar_lea.sflag [#allocation3], 10
  %461 = vsyncmov %s460
  %s462 = vpop.sfrf %461
  %p463 = scmp.eq.s32.totalorder %s462, 0
  %p464 = pneg %p463
  %466 = shalt.err (%p464)
  %s467 = scalar_lea.sflag [#allocation3], 11
  %468 = vsyncmov %s467
  %s469 = vpop.sfrf %468
  %p470 = scmp.eq.s32.totalorder %s469, 0
  %p471 = pneg %p470
  %473 = shalt.err (%p471)
  %s474 = scalar_lea.sflag [#allocation3], 12
  %475 = vsyncmov %s474
  %s476 = vpop.sfrf %475
  %p477 = scmp.eq.s32.totalorder %s476, 0
  %p478 = pneg %p477
  %480 = shalt.err (%p478)
  %s481 = scalar_lea.sflag [#allocation3], 13
  %482 = vsyncmov %s481
  %s483 = vpop.sfrf %482
  %p484 = scmp.eq.s32.totalorder %s483, 0
  %p485 = pneg %p484
  %487 = shalt.err (%p485)
  %s488 = scalar_lea.sflag [#allocation3], 14
  %489 = vsyncmov %s488
  %s490 = vpop.sfrf %489
  %p491 = scmp.eq.s32.totalorder %s490, 0
  %p492 = pneg %p491
  %494 = shalt.err (%p492)
  %s495 = scalar_lea.sflag [#allocation3], 15
  %496 = vsyncmov %s495
  %s497 = vpop.sfrf %496
  %p498 = scmp.eq.s32.totalorder %s497, 0
  %p499 = pneg %p498
  %501 = shalt.err (%p499)

</llo_original>
